<compile_context>
chip_gen: v7x
topology: tpu7x:2x2x1
jax: 0.10.0
libtpu: 0.0.40
codegen_flags: <defaults>
</compile_context>

<pallas_src>
import math
import jax
import jax.numpy as jnp
from jax.experimental import pallas as pl
from jax.experimental.pallas import tpu as pltpu

NOUT_PAD = 128  # lane-dense output width; real nout columns are sliced off


def _round_up(a, b):
    return ((a + b - 1) // b) * b


# ---------------------------------------------------------------------------
# Kernels
# ---------------------------------------------------------------------------
def _epilogue(acc, xi_ref, bg_ref, wfeat_ref, wx_ref, bout_ref, out_ref):
    # GraphConvolution bias + ReLU, then the folded linear tail.
    feat = jnp.maximum(acc + bg_ref[...], 0.0)
    out = (jnp.dot(feat, wfeat_ref[...], preferred_element_type=jnp.float32)
           + jnp.dot(xi_ref[...], wx_ref[...], preferred_element_type=jnp.float32)
           + bout_ref[...])
    out_ref[...] = out.astype(out_ref.dtype)


def bigcn_kernel(adj_ref, sup_ref, xi_ref, bg_ref, wfeat_ref, wx_ref,
                 bout_ref, out_ref):
    """Perf path: grid = (row blocks,); whole adj-column extent per step."""
    acc = jnp.dot(adj_ref[...], sup_ref[...], preferred_element_type=jnp.float32)
    _epilogue(acc, xi_ref, bg_ref, wfeat_ref, wx_ref, bout_ref, out_ref)


def bigcn_kernel_kblocked(adj_ref, sup_ref, xi_ref, bg_ref, wfeat_ref, wx_ref,
                          bout_ref, out_ref, acc_ref):
    """Validation path: grid = (row blocks, K blocks) with an f32 accumulator."""
    k = pl.program_id(1)

    @pl.when(k == 0)
    def _():
        acc_ref[...] = jnp.zeros_like(acc_ref)

    acc_ref[...] += jnp.dot(adj_ref[...], sup_ref[...],
                            preferred_element_type=jnp.float32)

    @pl.when(k == pl.num_programs(1) - 1)
    def _():
        _epilogue(acc_ref[...], xi_ref, bg_ref, wfeat_ref, wx_ref, bout_ref,
                  out_ref)


# ---------------------------------------------------------------------------
# Trace-time parameter folding (eval-mode dropout == identity)
# ---------------------------------------------------------------------------
def fold_and_pad_params(params, nout_pad=NOUT_PAD):
    prop = params["wg"].shape[1]
    nout = params["w3"].shape[1]
    assert params["w1"].shape[0] == prop + 32, "cat width must match layer1 rows"

    # cat([feat, x0], 1) @ w1 == feat @ w1a + x0 @ w1b, then two more linears.
    w1a = params["w1"][:prop, :]
    w1b = params["w1"][prop:, :]
    w_feat = w1a @ params["w2"] @ params["w3"]                    # (prop,  nout)
    w_x = params["w0"] @ w1b @ params["w2"] @ params["w3"]        # (nfeat, nout)
    b_out = ((((params["b0"] @ w1b) + params["b1"]) @ params["w2"]
              + params["b2"]) @ params["w3"] + params["b3"]).reshape(1, nout)

    # Zero-pad the output dimension to 128 lanes -> unmasked, lane-dense stores.
    pad = nout_pad - nout
    return dict(
        wg=params["wg"].astype(jnp.float32),
        bg=params["bg"].reshape(1, prop).astype(jnp.float32),
        w_feat=jnp.pad(w_feat, ((0, 0), (0, pad))).astype(jnp.float32),
        w_x=jnp.pad(w_x, ((0, 0), (0, pad))).astype(jnp.float32),
        b_out=jnp.pad(b_out, ((0, 0), (0, pad))).astype(jnp.float32),
        nout=nout,
    )


def prepare_adj(adj, n_pad, adj_dtype=jnp.bfloat16):
    """Pad + cast the adjacency ONCE (hoisted out of the per-call path)."""
    n = adj.shape[0]
    if n_pad != n:
        adj = jnp.pad(adj, ((0, n_pad - n), (0, n_pad - n)))
    return adj.astype(adj_dtype)


# ---------------------------------------------------------------------------
# Forward wrapper
# ---------------------------------------------------------------------------
def bigcn_forward(x, adj_pad, folded, *, N, tm=None, tk=None,
                  vmem_limit_bytes=8 * 1024 * 1024):
    n_pad = adj_pad.shape[0]
    nfeat = x.shape[1]
    prop = folded["wg"].shape[1]
    nout_pad = folded["w_feat"].shape[1]
    nout = folded["nout"]
    adj_dtype = adj_pad.dtype

    # --- tiles: must divide n_pad and satisfy the (8, 128) constraint --------
    if tm is None:
        tm = n_pad // 2 if (n_pad % 2 == 0 and (n_pad // 2) % 8 == 0) else n_pad
    if tk is None:
        tk = n_pad                                  # single K block (perf path)
    assert n_pad % tm == 0 and n_pad % tk == 0
    assert tm % 8 == 0 and (tk % 128 == 0 or tk == n_pad)

    # --- cheap per-call prep: pad x rows, precompute support in XLA ---------
    x_p = x.astype(jnp.float32)
    if n_pad != N:
        x_p = jnp.pad(x_p, ((0, n_pad - N), (0, 0)))
    support = jnp.dot(x_p, folded["wg"]).astype(adj_dtype)        # (n_pad, prop)

    grid_m = n_pad // tm
    num_k = n_pad // tk

    itemsize = jnp.dtype(adj_dtype).itemsize
    cost = pl.CostEstimate(
        flops=2 * n_pad * n_pad * prop + 2 * n_pad * (prop + nfeat) * nout_pad,
        transcendentals=0,
        bytes_accessed=(n_pad * n_pad * itemsize + n_pad * prop * itemsize
                        + n_pad * nfeat * 4 + n_pad * nout_pad * 4),
    )

    common_specs = [
        pl.BlockSpec((1, prop), lambda *a: (0, 0)),        # bg
        pl.BlockSpec((prop, nout_pad), lambda *a: (0, 0)),  # W_feat (folded)
        pl.BlockSpec((nfeat, nout_pad), lambda *a: (0, 0)),  # W_x   (folded)
        pl.BlockSpec((1, nout_pad), lambda *a: (0, 0)),     # b_out (folded)
    ]

    if num_k == 1:
        # Perf path: no reduction axis, no accumulator scratch.
        grid_spec = pltpu.PrefetchScalarGridSpec(
            num_scalar_prefetch=0,
            grid=(grid_m,),
            in_specs=[
                pl.BlockSpec((tm, n_pad), lambda i: (i, 0)),      # adj row tile
                pl.BlockSpec((n_pad, prop), lambda i: (0, 0)),    # support
                pl.BlockSpec((tm, nfeat), lambda i: (i, 0)),      # x row slice
            ] + common_specs,
            out_specs=pl.BlockSpec((tm, nout_pad), lambda i: (i, 0)),
        )
        kernel = bigcn_kernel
        dim_sem = ("parallel",)
    else:
        # Validation / large-N path: K-blocked accumulator (pattern P3).
        grid_spec = pltpu.PrefetchScalarGridSpec(
            num_scalar_prefetch=0,
            grid=(grid_m, num_k),
            in_specs=[
                pl.BlockSpec((tm, tk), lambda i, k: (i, k)),      # adj tile
                pl.BlockSpec((tk, prop), lambda i, k: (k, 0)),    # support K slice
                pl.BlockSpec((tm, nfeat), lambda i, k: (i, 0)),   # x row slice
            ] + common_specs,
            out_specs=pl.BlockSpec((tm, nout_pad), lambda i, k: (i, 0)),
            scratch_shapes=[pltpu.VMEM((tm, prop), jnp.float32)],
        )
        kernel = bigcn_kernel_kblocked
        dim_sem = ("parallel", "arbitrary")

    out = pl.pallas_call(
        kernel,
        out_shape=jax.ShapeDtypeStruct((n_pad, nout_pad), jnp.float32),
        grid_spec=grid_spec,
        compiler_params=pltpu.CompilerParams(
            dimension_semantics=dim_sem,
            vmem_limit_bytes=vmem_limit_bytes),
        cost_estimate=cost,
    )(adj_pad, support, x_p,
      folded["bg"], folded["w_feat"], folded["w_x"], folded["b_out"])

    return out[:N, :nout]


# ---------------------------------------------------------------------------
# Params / reference
# ---------------------------------------------------------------------------
def init_params(key, nfeat, nout, proportion):
    """Deterministic init matching the PyTorch reset_parameters() ranges."""
    def uni(k, shape, stdv):
        return jax.random.uniform(k, shape, jnp.float32, -stdv, stdv)

    ks = jax.random.split(key, 10)
    p = {}
    stdv = 1.0 / math.sqrt(proportion)                   # GraphConvolution
    p["wg"] = uni(ks[0], (nfeat, proportion), stdv)
    p["bg"] = uni(ks[1], (proportion,), stdv)
    stdv = 1.0 / math.sqrt(32)                           # layer0
    p["w0"] = uni(ks[2], (nfeat, 32), stdv)
    p["b0"] = uni(ks[3], (32,), stdv)
    stdv = 1.0 / math.sqrt(32)                           # layer1
    p["w1"] = uni(ks[4], (64, 32), stdv)
    p["b1"] = uni(ks[5], (32,), stdv)
    stdv = 1.0 / math.sqrt(16)                           # layer2
    p["w2"] = uni(ks[6], (32, 16), stdv)
    p["b2"] = uni(ks[7], (16,), stdv)
    stdv = 1.0 / math.sqrt(nout)                         # layer3
    p["w3"] = uni(ks[8], (16, nout), stdv)
    p["b3"] = uni(ks[9], (nout,), stdv)
    return p


def bigcn_reference(x, adj, p):
    """Plain-JAX reference mirroring the PyTorch forward (eval mode)."""
    feat = jax.nn.relu(adj @ (x @ p["wg"]) + p["bg"])
    h = x @ p["w0"] + p["b0"]
    h = jnp.concatenate([feat, h], axis=1)
    h = h @ p["w1"] + p["b1"]
    h = h @ p["w2"] + p["b2"]
    return h @ p["w3"] + p["b3"]


# ---------------------------------------------------------------------------
if __name__ == "__main__":
    # proportion must be 32 so cat([feat, x0], 1) has width 64 (layer1 is 64x32).
    N, nfeat, nout, proportion = 600, 16, 8, 32

    key = jax.random.PRNGKey(0)
    k_x, k_adj, k_p = jax.random.split(key, 3)

    x = jax.random.normal(k_x, (N, nfeat), jnp.float32)
    # simple dense row-normalized adjacency stand-in
    a = jax.random.uniform(k_adj, (N, N), jnp.float32)
    adj = a / jnp.sum(a, axis=1, keepdims=True)

    params = init_params(k_p, nfeat, nout, proportion)
    ref = bigcn_reference(x, adj, params)

    n_pad = _round_up(N, 128)                   # 600 -> 640 (tight padding)
    folded = fold_and_pad_params(params)

    # 1) exact-structure check: f32 adjacency, 128x128 tiles -> 5x5 grid
    #    exercising padding + the K-axis accumulator path.
    adj_f32 = prepare_adj(adj, n_pad, jnp.float32)
    out_f32 = jax.block_until_ready(
        bigcn_forward(x, adj_f32, folded, N=N, tm=128, tk=128))
    assert out_f32.shape == (N, nout)
    assert jnp.allclose(out_f32, ref, atol=1e-3, rtol=1e-3), "f32 mismatch"

    # 2) performance configuration: bf16 adjacency pre-padded/pre-cast ONCE
    #    (hoisted out of the per-call path), 2 balanced row blocks, no K axis.
    adj_bf16 = jax.block_until_ready(prepare_adj(adj, n_pad, jnp.bfloat16))
    fwd = jax.jit(lambda xv, adjv: bigcn_forward(xv, adjv, folded, N=N))
    out_bf16 = jax.block_until_ready(fwd(x, adj_bf16))
    assert out_bf16.shape == (N, nout)
    assert jnp.allclose(out_bf16, ref, atol=2e-2, rtol=2e-2), "bf16 mismatch"

    print("KERNEL_OK")
</pallas_src>

<mosaic_0001>
module attributes {stable_mosaic.version = 11 : i64} {
  func.func @bigcn_kernel_kblocked(%arg0: i32, %arg1: i32, %arg2: memref<128x128xf32, #tpu.memory_space<vmem>>, %arg3: memref<128x32xf32, #tpu.memory_space<vmem>>, %arg4: memref<128x16xf32, #tpu.memory_space<vmem>>, %arg5: memref<1x32xf32, #tpu.memory_space<vmem>>, %arg6: memref<32x128xf32, #tpu.memory_space<vmem>>, %arg7: memref<16x128xf32, #tpu.memory_space<vmem>>, %arg8: memref<1x128xf32, #tpu.memory_space<vmem>>, %arg9: memref<128x128xf32, #tpu.memory_space<vmem>>, %arg10: memref<128x32xf32, #tpu.memory_space<vmem>>) attributes {dimension_semantics = [#tpu.dimension_semantics<parallel>, #tpu.dimension_semantics<arbitrary>], iteration_bounds = array<i64: 5, 5>, scalar_prefetch = 0 : i64, scratch_operands = 1 : i64, tpu.core_type = #tpu.core_type<tc>, window_params = [{transform_indices = @transform_0, window_bounds = array<i64: 128, 128>}, {transform_indices = @transform_1, window_bounds = array<i64: 128, 32>}, {transform_indices = @transform_2, window_bounds = array<i64: 128, 16>}, {pipeline_mode = #tpu.pipeline_mode<synchronous>, transform_indices = @transform_3, window_bounds = array<i64: 1, 32>}, {pipeline_mode = #tpu.pipeline_mode<synchronous>, transform_indices = @transform_4, window_bounds = array<i64: 32, 128>}, {pipeline_mode = #tpu.pipeline_mode<synchronous>, transform_indices = @transform_5, window_bounds = array<i64: 16, 128>}, {pipeline_mode = #tpu.pipeline_mode<synchronous>, transform_indices = @transform_6, window_bounds = array<i64: 1, 128>}, {transform_indices = @transform_7, window_bounds = array<i64: 128, 128>}]} {
    %c0_i32 = arith.constant 0 : i32
    %0 = arith.cmpi eq, %arg1, %c0_i32 : i32
    %1 = arith.extui %0 : i1 to i32
    %c0_i32_0 = arith.constant 0 : i32
    %2 = arith.cmpi ne, %1, %c0_i32_0 : i32
    scf.if %2 {
      %cst_9 = arith.constant 0.000000e+00 : f32
      %12 = vector.broadcast %cst_9 : f32 to vector<128x32xf32>
      %c0_10 = arith.constant 0 : index
      %c0_11 = arith.constant 0 : index
      %13 = vector.load %arg10[%c0_10, %c0_11] : memref<128x32xf32, #tpu.memory_space<vmem>>, vector<128x32xf32>
      tpu.vector_store %arg10[%c0_10, %c0_11], %12 {strides = array<i32>} : memref<128x32xf32, #tpu.memory_space<vmem>>, vector<128x32xf32>,
    } else {
    }
    %c0 = arith.constant 0 : index
    %c0_1 = arith.constant 0 : index
    %3 = vector.load %arg10[%c0, %c0_1] : memref<128x32xf32, #tpu.memory_space<vmem>>, vector<128x32xf32>
    %c0_2 = arith.constant 0 : index
    %c0_3 = arith.constant 0 : index
    %4 = vector.load %arg2[%c0_2, %c0_3] : memref<128x128xf32, #tpu.memory_space<vmem>>, vector<128x128xf32>
    %c0_4 = arith.constant 0 : index
    %c0_5 = arith.constant 0 : index
    %5 = vector.load %arg3[%c0_4, %c0_5] : memref<128x32xf32, #tpu.memory_space<vmem>>, vector<128x32xf32>
    %cst = arith.constant dense<0.000000e+00> : vector<128x32xf32>
    %6 = tpu.matmul %4, %5, %cst {dimension_numbers = #tpu.dot_dimension_numbers<[1], [0], [0], [1], [0, 0, 1, 1], [], []>} : vector<128x128xf32>, vector<128x32xf32>, vector<128x32xf32> -> vector<128x32xf32>
    %7 = arith.addf %3, %6 : vector<128x32xf32>
    %c0_6 = arith.constant 0 : index
    %c0_7 = arith.constant 0 : index
    %8 = vector.load %arg10[%c0_6, %c0_7] : memref<128x32xf32, #tpu.memory_space<vmem>>, vector<128x32xf32>
    tpu.vector_store %arg10[%c0_6, %c0_7], %7 {strides = array<i32>} : memref<128x32xf32, #tpu.memory_space<vmem>>, vector<128x32xf32>,
    %c4_i32 = arith.constant 4 : i32
    %9 = arith.cmpi eq, %arg1, %c4_i32 : i32
    %10 = arith.extui %9 : i1 to i32
    %c0_i32_8 = arith.constant 0 : i32
    %11 = arith.cmpi ne, %10, %c0_i32_8 : i32
    scf.if %11 {
      %c0_9 = arith.constant 0 : index
      %c0_10 = arith.constant 0 : index
      %12 = vector.load %arg10[%c0_9, %c0_10] : memref<128x32xf32, #tpu.memory_space<vmem>>, vector<128x32xf32>
      %c0_11 = arith.constant 0 : index
      %c0_12 = arith.constant 0 : index
      %13 = vector.load %arg5[%c0_11, %c0_12] : memref<1x32xf32, #tpu.memory_space<vmem>>, vector<1x32xf32>
      %14 = vector.broadcast %13 : vector<1x32xf32> to vector<128x32xf32>
      %15 = arith.addf %12, %14 : vector<128x32xf32>
      %cst_13 = arith.constant 0.000000e+00 : f32
      %16 = vector.broadcast %cst_13 : f32 to vector<128x32xf32>
      %17 = arith.maximumf %15, %16 : vector<128x32xf32>
      %c0_14 = arith.constant 0 : index
      %c0_15 = arith.constant 0 : index
      %18 = vector.load %arg6[%c0_14, %c0_15] : memref<32x128xf32, #tpu.memory_space<vmem>>, vector<32x128xf32>
      %cst_16 = arith.constant dense<0.000000e+00> : vector<128x128xf32>
      %19 = tpu.matmul %17, %18, %cst_16 {dimension_numbers = #tpu.dot_dimension_numbers<[1], [0], [0], [1], [0, 0, 1, 1], [], []>} : vector<128x32xf32>, vector<32x128xf32>, vector<128x128xf32> -> vector<128x128xf32>
      %c0_17 = arith.constant 0 : index
      %c0_18 = arith.constant 0 : index
      %20 = vector.load %arg4[%c0_17, %c0_18] : memref<128x16xf32, #tpu.memory_space<vmem>>, vector<128x16xf32>
      %c0_19 = arith.constant 0 : index
      %c0_20 = arith.constant 0 : index
      %21 = vector.load %arg7[%c0_19, %c0_20] : memref<16x128xf32, #tpu.memory_space<vmem>>, vector<16x128xf32>
      %cst_21 = arith.constant dense<0.000000e+00> : vector<128x128xf32>
      %22 = tpu.matmul %20, %21, %cst_21 {dimension_numbers = #tpu.dot_dimension_numbers<[1], [0], [0], [1], [0, 0, 1, 1], [], []>} : vector<128x16xf32>, vector<16x128xf32>, vector<128x128xf32> -> vector<128x128xf32>
      %23 = arith.addf %19, %22 : vector<128x128xf32>
      %c0_22 = arith.constant 0 : index
      %c0_23 = arith.constant 0 : index
      %24 = vector.load %arg8[%c0_22, %c0_23] : memref<1x128xf32, #tpu.memory_space<vmem>>, vector<1x128xf32>
      %25 = vector.broadcast %24 : vector<1x128xf32> to vector<128x128xf32>
      %26 = arith.addf %23, %25 : vector<128x128xf32>
      %c0_24 = arith.constant 0 : index
      %c0_25 = arith.constant 0 : index
      %27 = vector.load %arg9[%c0_24, %c0_25] : memref<128x128xf32, #tpu.memory_space<vmem>>, vector<128x128xf32>
      tpu.vector_store %arg9[%c0_24, %c0_25], %26 {strides = array<i32>} : memref<128x128xf32, #tpu.memory_space<vmem>>, vector<128x128xf32>,
    } else {
    }
    return
  }
  func.func @transform_0(%arg0: i32, %arg1: i32) -> (i32, i32) {
    %c0_i32 = arith.constant 0 : i32
    return %arg0, %arg1 : i32, i32
  }
  func.func @transform_1(%arg0: i32, %arg1: i32) -> (i32, i32) {
    %c0_i32 = arith.constant 0 : i32
    %c0_i32_0 = arith.constant 0 : i32
    return %arg1, %c0_i32 : i32, i32
  }
  func.func @transform_2(%arg0: i32, %arg1: i32) -> (i32, i32) {
    %c0_i32 = arith.constant 0 : i32
    %c0_i32_0 = arith.constant 0 : i32
    return %arg0, %c0_i32 : i32, i32
  }
  func.func @transform_3(%arg0: i32, %arg1: i32) -> (i32, i32) {
    %c0_i32 = arith.constant 0 : i32
    %c0_i32_0 = arith.constant 0 : i32
    %c0_i32_1 = arith.constant 0 : i32
    return %c0_i32, %c0_i32_0 : i32, i32
  }
  func.func @transform_4(%arg0: i32, %arg1: i32) -> (i32, i32) {
    %c0_i32 = arith.constant 0 : i32
    %c0_i32_0 = arith.constant 0 : i32
    %c0_i32_1 = arith.constant 0 : i32
    return %c0_i32, %c0_i32_0 : i32, i32
  }
  func.func @transform_5(%arg0: i32, %arg1: i32) -> (i32, i32) {
    %c0_i32 = arith.constant 0 : i32
    %c0_i32_0 = arith.constant 0 : i32
    %c0_i32_1 = arith.constant 0 : i32
    return %c0_i32, %c0_i32_0 : i32, i32
  }
  func.func @transform_6(%arg0: i32, %arg1: i32) -> (i32, i32) {
    %c0_i32 = arith.constant 0 : i32
    %c0_i32_0 = arith.constant 0 : i32
    %c0_i32_1 = arith.constant 0 : i32
    return %c0_i32, %c0_i32_0 : i32, i32
  }
  func.func @transform_7(%arg0: i32, %arg1: i32) -> (i32, i32) {
    %c0_i32 = arith.constant 0 : i32
    %c0_i32_0 = arith.constant 0 : i32
    return %arg0, %c0_i32 : i32, i32
  }
}

</mosaic_0001>

<llo_original>
// kernel: tpu_custom_call.1
$region0: #{tpu_custom_call.1}
  #allocation0 [shape = 'u32[]', space=smem, size = 0x4, offset = 0x4, fixed_abs, tag = 'smem constant byte address 0x4 - core index']
  #allocation1 [shape = 'u32[144,128]{1,0:T(1,128)}', space=vmem, size = 0x12000, scoped, tag = 'internal scratch']
  #allocation2 [shape = 'f32[128,32]{1,0:T(8,128)}', space=vmem, size = 0x10000, scoped, tag = 'scratch operand']
  %s0 = inlined_call_operand.hbm [shape: f32[640,640], index: 0, kind: input, shape index: {}]
  %s1 = inlined_call_operand.vmem [shape: f32[640,32], index: 1, kind: input, shape index: {}]
  %s2 = inlined_call_operand.vmem [shape: f32[640,16], index: 2, kind: input, shape index: {}]
  %s3 = inlined_call_operand.hbm [shape: f32[1,32], index: 3, kind: input, shape index: {}]
  %s4 = inlined_call_operand.hbm [shape: f32[32,128], index: 4, kind: input, shape index: {}]
  %s5 = inlined_call_operand.hbm [shape: f32[16,128], index: 5, kind: input, shape index: {}]
  %s6 = inlined_call_operand.hbm [shape: f32[1,128], index: 6, kind: input, shape index: {}]
  %s7 = inlined_call_operand.hbm [shape: f32[640,128], index: 7, kind: output, shape index: {}]
  %s8 = sld [smem:[#allocation0]]
  $region89: #{tpu_custom_call.1} parent=0
    _
  %s10 = ssub.s32 1, %s8
  %s11 = scalar_select 0, %s10, %s8
  $region1: #{tpu_custom_call.1} parent=0
    #allocation3 [shape = 'u8[131072]{0}', space=vmem, size = 0x20000, scoped, tag = 'input window, operand 0']
    #allocation4 [shape = 's32[2]{0}', space=sflag, size = 0x8, scoped, tag = 'scoped memory for tpu_custom_call.1']
    #allocation5 [shape = 's32[2]{0}', space=sflag, size = 0x8, scoped, tag = 'scoped memory for tpu_custom_call.1']
    #allocation6 [shape = 'u8[512]{0}', space=vmem, size = 0x400, scoped, tag = 'input window, operand 3, single buffered']
    #allocation7 [shape = 's32[1]{0}', space=sflag, size = 0x4, scoped, tag = 'scoped memory for tpu_custom_call.1']
    #allocation8 [shape = 'u8[16384]{0}', space=vmem, size = 0x4000, scoped, tag = 'input window, operand 4, single buffered']
    #allocation9 [shape = 'u8[8192]{0}', space=vmem, size = 0x2000, scoped, tag = 'input window, operand 5, single buffered']
    #allocation10 [shape = 's32[1]{0}', space=sflag, size = 0x4, scoped, tag = 'scoped memory for tpu_custom_call.1']
    #allocation11 [shape = 'u8[512]{0}', space=vmem, size = 0x400, scoped, tag = 'input window, operand 6, single buffered']
    #allocation12 [shape = 'u8[131072]{0}', space=vmem, size = 0x20000, scoped, tag = 'output window, operand 0']
    %12 = vsyncpa [#allocation4], 0
    %s13 = scalar_lea.sflag [#allocation4], 1
    %14 = vsyncpa %s13, 0
    %15 = vsyncpa [#allocation7], 0
    %16 = vsyncpa [#allocation10], 0
    %17 = vsyncpa [#allocation5], 0
    %s18 = scalar_lea.sflag [#allocation5], 1
    %19 = vsyncpa %s18, 0
    loop: start=0, step=1, limit=27
    $region2: #{tpu_custom_call.1} parent=1 // loop_pre_header
      _
    $region3: #{tpu_custom_call.1} parent=1 // loop_header
      %s21 = sphi 0, %s25
      %p22 = scmp.ge.s32.totalorder %s21, 27
      %s28 = sphi 0, %s40
      %s29 = sphi 0, %s36
      %s30 = sphi 0, %s28
      %s31 = sphi 0, %s29
      %s32 = sphi 0, %s30
      %s33 = sphi 0, %s31
      %s45 = sphi 0, %s47
      %s48 = sphi 0, %s45
      %s49 = sphi 0, %s48
      %s65 = sphi 0, %s49
      %s71 = sphi 0, %s73
      %s74 = sphi 0, %s71
      %s75 = sphi 0, %s74
      %s91 = sphi 0, %s75
      %s97 = sphi 0, %s99
      %s100 = sphi 0, %s97
      %s101 = sphi 0, %s100
      %s117 = sphi 0, %s101
      %s121 = sphi 0, %s121
      %s123 = sphi 0, %s121
      %s124 = sphi 0, %s123
      %s138 = sphi 0, %s124
      %s142 = sphi 0, %s142
      %s144 = sphi 0, %s142
      %s145 = sphi 0, %s144
      %s159 = sphi 0, %s145
      %s163 = sphi 0, %s163
      %s165 = sphi 0, %s163
      %s166 = sphi 0, %s165
      %s180 = sphi 0, %s166
      %s184 = sphi 0, %s184
      %s186 = sphi 0, %s184
      %s187 = sphi 0, %s186
      %s201 = sphi 0, %s187
      %s207 = sphi 0, %s209
      %s210 = sphi 0, %s207
      %s211 = sphi 0, %s210
      %s227 = sphi 0, %s211
    $region4: #{tpu_custom_call.1} parent=1 // loop_header_branch
      %24 = sbr.rel (%p22) target = $region8
    $region5: #{tpu_custom_call.1} parent=1 // loop_body
      %s26 = ssub.s32 %s21, 1
      %s27 = ssub.s32 %s21, 2
      %s34 = sadd.s32 1, %s29
      %p35 = scmp.ge.s32.totalorder %s34, 5
      %s36 = scalar_select %p35, 0, %s34
      %s37 = sadd.s32 1, %s28
      %s38 = scalar_select %p35, %s37, %s28
      %p39 = scmp.ge.s32.totalorder %s38, 5
      %s40 = scalar_select %p39, 0, %s38
      %s41 = ssub.s32 %s28, %s40
      %s42 = ssub.s32 %s29, %s36
      %s43 = sor.u32 %s41, %s42
      %p44 = scmp.eq.s32.totalorder %s43, 0
      %s46 = sadd.s32 %s45, 1
      %s47 = scalar_select %p44, %s45, %s46
      %p50 = pneg %p44
      %p51 = scmp.eq.s32.totalorder %s21, 24
      %p52 = por %p50, %p51
      %p53 = scmp.ne.s32.totalorder %s45, %s48
      %p54 = scmp.eq.s32.totalorder %s21, 0
      %p55 = por %p53, %p54
      %p56 = scmp.ne.s32.totalorder %s45, %s48
      %p57 = scmp.eq.s32.totalorder %s26, 24
      %p58 = por %p56, %p57
      %p59 = scmp.ne.s32.totalorder %s48, %s49
      %p60 = scmp.eq.s32.totalorder %s26, 0
      %p61 = por %p59, %p60
      %p62 = scmp.ne.s32.totalorder %s48, %s49
      %p63 = scmp.eq.s32.totalorder %s27, 24
      %p64 = por %p62, %p63
      %p66 = scmp.ne.s32.totalorder %s49, %s65
      %p67 = scmp.eq.s32.totalorder %s27, 0
      %p68 = por %p66, %p67
      %s69 = ssub.s32 %s29, %s36
      %p70 = scmp.eq.s32.totalorder %s69, 0
      %s72 = sadd.s32 %s71, 1
      %s73 = scalar_select %p70, %s71, %s72
      %p76 = pneg %p70
      %p77 = scmp.eq.s32.totalorder %s21, 24
      %p78 = por %p76, %p77
      %p79 = scmp.ne.s32.totalorder %s71, %s74
      %p80 = scmp.eq.s32.totalorder %s21, 0
      %p81 = por %p79, %p80
      %p82 = scmp.ne.s32.totalorder %s71, %s74
      %p83 = scmp.eq.s32.totalorder %s26, 24
      %p84 = por %p82, %p83
      %p85 = scmp.ne.s32.totalorder %s74, %s75
      %p86 = scmp.eq.s32.totalorder %s26, 0
      %p87 = por %p85, %p86
      %p88 = scmp.ne.s32.totalorder %s74, %s75
      %p89 = scmp.eq.s32.totalorder %s27, 24
      %p90 = por %p88, %p89
      %p92 = scmp.ne.s32.totalorder %s75, %s91
      %p93 = scmp.eq.s32.totalorder %s27, 0
      %p94 = por %p92, %p93
      %s95 = ssub.s32 %s28, %s40
      %p96 = scmp.eq.s32.totalorder %s95, 0
      %s98 = sadd.s32 %s97, 1
      %s99 = scalar_select %p96, %s97, %s98
      %p102 = pneg %p96
      %p103 = scmp.eq.s32.totalorder %s21, 24
      %p104 = por %p102, %p103
      %p105 = scmp.ne.s32.totalorder %s97, %s100
      %p106 = scmp.eq.s32.totalorder %s21, 0
      %p107 = por %p105, %p106
      %p108 = scmp.ne.s32.totalorder %s97, %s100
      %p109 = scmp.eq.s32.totalorder %s26, 24
      %p110 = por %p108, %p109
      %p111 = scmp.ne.s32.totalorder %s100, %s101
      %p112 = scmp.eq.s32.totalorder %s26, 0
      %p113 = por %p111, %p112
      %p114 = scmp.ne.s32.totalorder %s100, %s101
      %p115 = scmp.eq.s32.totalorder %s27, 24
      %p116 = por %p114, %p115
      %p118 = scmp.ne.s32.totalorder %s101, %s117
      %p119 = scmp.eq.s32.totalorder %s27, 0
      %p120 = por %p118, %p119
      %s122 = sadd.s32 %s121, 1
      %p125 = scmp.eq.s32.totalorder %s21, 24
      %p126 = scmp.ne.s32.totalorder %s121, %s123
      %p127 = scmp.eq.s32.totalorder %s21, 0
      %p128 = por %p126, %p127
      %p129 = scmp.ne.s32.totalorder %s121, %s123
      %p130 = scmp.eq.s32.totalorder %s26, 24
      %p131 = por %p129, %p130
      %p132 = scmp.ne.s32.totalorder %s123, %s124
      %p133 = scmp.eq.s32.totalorder %s26, 0
      %p134 = por %p132, %p133
      %p135 = scmp.ne.s32.totalorder %s123, %s124
      %p136 = scmp.eq.s32.totalorder %s27, 24
      %p137 = por %p135, %p136
      %p139 = scmp.ne.s32.totalorder %s124, %s138
      %p140 = scmp.eq.s32.totalorder %s27, 0
      %p141 = por %p139, %p140
      %s143 = sadd.s32 %s142, 1
      %p146 = scmp.eq.s32.totalorder %s21, 24
      %p147 = scmp.ne.s32.totalorder %s142, %s144
      %p148 = scmp.eq.s32.totalorder %s21, 0
      %p149 = por %p147, %p148
      %p150 = scmp.ne.s32.totalorder %s142, %s144
      %p151 = scmp.eq.s32.totalorder %s26, 24
      %p152 = por %p150, %p151
      %p153 = scmp.ne.s32.totalorder %s144, %s145
      %p154 = scmp.eq.s32.totalorder %s26, 0
      %p155 = por %p153, %p154
      %p156 = scmp.ne.s32.totalorder %s144, %s145
      %p157 = scmp.eq.s32.totalorder %s27, 24
      %p158 = por %p156, %p157
      %p160 = scmp.ne.s32.totalorder %s145, %s159
      %p161 = scmp.eq.s32.totalorder %s27, 0
      %p162 = por %p160, %p161
      %s164 = sadd.s32 %s163, 1
      %p167 = scmp.eq.s32.totalorder %s21, 24
      %p168 = scmp.ne.s32.totalorder %s163, %s165
      %p169 = scmp.eq.s32.totalorder %s21, 0
      %p170 = por %p168, %p169
      %p171 = scmp.ne.s32.totalorder %s163, %s165
      %p172 = scmp.eq.s32.totalorder %s26, 24
      %p173 = por %p171, %p172
      %p174 = scmp.ne.s32.totalorder %s165, %s166
      %p175 = scmp.eq.s32.totalorder %s26, 0
      %p176 = por %p174, %p175
      %p177 = scmp.ne.s32.totalorder %s165, %s166
      %p178 = scmp.eq.s32.totalorder %s27, 24
      %p179 = por %p177, %p178
      %p181 = scmp.ne.s32.totalorder %s166, %s180
      %p182 = scmp.eq.s32.totalorder %s27, 0
      %p183 = por %p181, %p182
      %s185 = sadd.s32 %s184, 1
      %p188 = scmp.eq.s32.totalorder %s21, 24
      %p189 = scmp.ne.s32.totalorder %s184, %s186
      %p190 = scmp.eq.s32.totalorder %s21, 0
      %p191 = por %p189, %p190
      %p192 = scmp.ne.s32.totalorder %s184, %s186
      %p193 = scmp.eq.s32.totalorder %s26, 24
      %p194 = por %p192, %p193
      %p195 = scmp.ne.s32.totalorder %s186, %s187
      %p196 = scmp.eq.s32.totalorder %s26, 0
      %p197 = por %p195, %p196
      %p198 = scmp.ne.s32.totalorder %s186, %s187
      %p199 = scmp.eq.s32.totalorder %s27, 24
      %p200 = por %p198, %p199
      %p202 = scmp.ne.s32.totalorder %s187, %s201
      %p203 = scmp.eq.s32.totalorder %s27, 0
      %p204 = por %p202, %p203
      %s205 = ssub.s32 %s28, %s40
      %p206 = scmp.eq.s32.totalorder %s205, 0
      %s208 = sadd.s32 %s207, 1
      %s209 = scalar_select %p206, %s207, %s208
      %p212 = pneg %p206
      %p213 = scmp.eq.s32.totalorder %s21, 24
      %p214 = por %p212, %p213
      %p215 = scmp.ne.s32.totalorder %s207, %s210
      %p216 = scmp.eq.s32.totalorder %s21, 0
      %p217 = por %p215, %p216
      %p218 = scmp.ne.s32.totalorder %s207, %s210
      %p219 = scmp.eq.s32.totalorder %s26, 24
      %p220 = por %p218, %p219
      %p221 = scmp.ne.s32.totalorder %s210, %s211
      %p222 = scmp.eq.s32.totalorder %s26, 0
      %p223 = por %p221, %p222
      %p224 = scmp.ne.s32.totalorder %s210, %s211
      %p225 = scmp.eq.s32.totalorder %s27, 24
      %p226 = por %p224, %p225
      %p228 = scmp.ne.s32.totalorder %s211, %s227
      %p229 = scmp.eq.s32.totalorder %s27, 0
      %p230 = por %p228, %p229
      %p231 = scmp.le.s32.totalorder 1, %s21
      %p232 = scmp.lt.s32.totalorder %s21, 26
      %p233 = pnand %p231, %p232
      %p234 = pneg %p233
      // Predicated region
      $region9: #{tpu_custom_call.1} parent=5 // pred_check
        _
      $region10: #{tpu_custom_call.1} parent=5 // pred_check_branch
        %236 = sbr.rel (%p233) target = $region12
      $region11: #{tpu_custom_call.1} parent=5 // pred_region
        %s237 = ssub.s32 %s21, 1
        // Predicated region
        $region13: #{tpu_custom_call.1} parent=11 // pred_check
          %p238 = pneg %p134
        $region14: #{tpu_custom_call.1} parent=11 // pred_check_branch
          %240 = sbr.rel (%p238) target = $region16
        $region15: #{tpu_custom_call.1} parent=11 // pred_region
          %s242 = ssub.s32 16, 16
          %243 = vsyncadd [#allocation7], %s242
          %s245 = sshll.u32 [#allocation6], 4
          %s246 = int_to_ptr.vmem [resolvable:$true] %s245
          %248 = dma.hbm_to_vmem [thread:$0]  %s3, 16, %s246, [#allocation7]
        $region16: #{tpu_custom_call.1} parent=11 // pred_fallthru
          _
        // Predicated region
        $region17: #{tpu_custom_call.1} parent=11 // pred_check
          %p249 = pneg %p155
        $region18: #{tpu_custom_call.1} parent=11 // pred_check_branch
          %251 = sbr.rel (%p249) target = $region20
        $region19: #{tpu_custom_call.1} parent=11 // pred_region
          %s253 = ssub.s32 512, 512
          %254 = vsyncadd [#allocation7], %s253
          %s255 = sshll.u32 [#allocation8], 4
          %s256 = int_to_ptr.vmem [resolvable:$true] %s255
          %261 = dma.hbm_to_vmem [thread:$0]  %s4, 512, %s256, [#allocation7], 128, 128, 8
        $region20: #{tpu_custom_call.1} parent=11 // pred_fallthru
          _
        // Predicated region
        $region21: #{tpu_custom_call.1} parent=11 // pred_check
          %p262 = pneg %p176
        $region22: #{tpu_custom_call.1} parent=11 // pred_check_branch
          %264 = sbr.rel (%p262) target = $region24
        $region23: #{tpu_custom_call.1} parent=11 // pred_region
          %s266 = ssub.s32 256, 256
          %267 = vsyncadd [#allocation10], %s266
          %s268 = sshll.u32 [#allocation9], 4
          %s269 = int_to_ptr.vmem [resolvable:$true] %s268
          %274 = dma.hbm_to_vmem [thread:$0]  %s5, 256, %s269, [#allocation10], 128, 128, 8
        $region24: #{tpu_custom_call.1} parent=11 // pred_fallthru
          _
        // Predicated region
        $region25: #{tpu_custom_call.1} parent=11 // pred_check
          %p275 = pneg %p197
        $region26: #{tpu_custom_call.1} parent=11 // pred_check_branch
          %277 = sbr.rel (%p275) target = $region28
        $region27: #{tpu_custom_call.1} parent=11 // pred_region
          %s279 = ssub.s32 16, 16
          %280 = vsyncadd [#allocation10], %s279
          %s282 = sshll.u32 [#allocation11], 4
          %s283 = int_to_ptr.vmem [resolvable:$true] %s282
          %285 = dma.hbm_to_vmem [thread:$0]  %s6, 16, %s283, [#allocation10]
        $region28: #{tpu_custom_call.1} parent=11 // pred_fallthru
          _
      $region12: #{tpu_custom_call.1} parent=5 // pred_fallthru
        _
      %p286 = scmp.lt.s32.totalorder %s21, 25
      // Predicated region
      $region29: #{tpu_custom_call.1} parent=5 // pred_check
        %p287 = pneg %p286
      $region30: #{tpu_custom_call.1} parent=5 // pred_check_branch
        %289 = sbr.rel (%p287) target = $region32
      $region31: #{tpu_custom_call.1} parent=5 // pred_region
        // Predicated region
        $region33: #{tpu_custom_call.1} parent=31 // pred_check
          %p290 = pneg %p55
        $region34: #{tpu_custom_call.1} parent=31 // pred_check_branch
          %292 = sbr.rel (%p290) target = $region36
        $region35: #{tpu_custom_call.1} parent=31 // pred_region
          %s293 = sand.u32 %s45, 1
          %s294 = scalar_lea.sflag [#allocation4], %s293
          %s295 = sand.u32 %s45, 1
          %s296 = smul.addr %s295, 128
          %s297 = scalar_lea.vmem [#allocation3], %s296
          %s298 = smul.u32 16, %s28
          %s300 = ssub.s32 2048, 2048
          %301 = vsyncadd %s294, %s300
          %s302 = smul.addr %s298, 5
          %s303 = sadd.s32 %s29, %s302
          %s304 = smul.addr %s303, 128
          %s305 = scalar_lea.hbm %s0, %s304
          %s306 = sshll.u32 %s297, 4
          %s307 = int_to_ptr.vmem [resolvable:$true] %s306
          %312 = dma.hbm_to_vmem [thread:$0]  %s305, 2048, %s307, %s294, 640, 128, 8
        $region36: #{tpu_custom_call.1} parent=31 // pred_fallthru
          _
        // Predicated region
        $region37: #{tpu_custom_call.1} parent=31 // pred_check
          %p313 = pneg %p81
        $region38: #{tpu_custom_call.1} parent=31 // pred_check_branch
          %315 = sbr.rel (%p313) target = $region40
        $region39: #{tpu_custom_call.1} parent=31 // pred_region
          %s316 = smul.u32 16, %s29
          %p317 = scmp.lt.s32.totalorder %s316, 79
          %s318 = scalar_select %p317, %s316, 79
          %s319 = smul.addr %s318, 8
          %s320 = scalar_lea.vmem %s1, %s319
          %s321 = smul.u32 16, %s29
        $region40: #{tpu_custom_call.1} parent=31 // pred_fallthru
          _
        // Predicated region
        $region41: #{tpu_custom_call.1} parent=31 // pred_check
          %p322 = pneg %p107
        $region42: #{tpu_custom_call.1} parent=31 // pred_check_branch
          %324 = sbr.rel (%p322) target = $region44
        $region43: #{tpu_custom_call.1} parent=31 // pred_region
          %s325 = smul.u32 16, %s28
          %p326 = scmp.lt.s32.totalorder %s325, 79
          %s327 = scalar_select %p326, %s325, 79
          %s328 = smul.addr %s327, 8
          %s329 = scalar_lea.vmem %s2, %s328
          %s330 = smul.u32 16, %s28
        $region44: #{tpu_custom_call.1} parent=31 // pred_fallthru
          _
      $region32: #{tpu_custom_call.1} parent=5 // pred_fallthru
        _
      %p331 = scmp.le.s32.totalorder 1, %s21
      %p332 = scmp.lt.s32.totalorder %s21, 26
      %p333 = pnand %p331, %p332
      %p334 = pneg %p333
      // Predicated region
      $region45: #{tpu_custom_call.1} parent=5 // pred_check
        _
      $region46: #{tpu_custom_call.1} parent=5 // pred_check_branch
        %336 = sbr.rel (%p333) target = $region48
      $region47: #{tpu_custom_call.1} parent=5 // pred_region
        %s337 = ssub.s32 %s21, 1
        %s338 = sand.u32 %s48, 1
        %s339 = scalar_lea.sflag [#allocation4], %s338
        %s340 = sand.u32 %s48, 1
        %s341 = smul.addr %s340, 128
        %s342 = scalar_lea.vmem [#allocation3], %s341
        // Predicated region
        $region49: #{tpu_custom_call.1} parent=47 // pred_check
          %p343 = pneg %p61
        $region50: #{tpu_custom_call.1} parent=47 // pred_check_branch
          %345 = sbr.rel (%p343) target = $region52
        $region51: #{tpu_custom_call.1} parent=47 // pred_region
          %346 = dma.done %s339, 2048
        $region52: #{tpu_custom_call.1} parent=47 // pred_fallthru
          _
        // Predicated region
        $region53: #{tpu_custom_call.1} parent=47 // pred_check
          %p347 = pneg %p134
        $region54: #{tpu_custom_call.1} parent=47 // pred_check_branch
          %349 = sbr.rel (%p347) target = $region56
        $region55: #{tpu_custom_call.1} parent=47 // pred_region
          %350 = dma.done [#allocation7], 16
        $region56: #{tpu_custom_call.1} parent=47 // pred_fallthru
          _
        // Predicated region
        $region57: #{tpu_custom_call.1} parent=47 // pred_check
          %p351 = pneg %p155
        $region58: #{tpu_custom_call.1} parent=47 // pred_check_branch
          %353 = sbr.rel (%p351) target = $region60
        $region59: #{tpu_custom_call.1} parent=47 // pred_region
          %354 = dma.done [#allocation7], 512
        $region60: #{tpu_custom_call.1} parent=47 // pred_fallthru
          _
        // Predicated region
        $region61: #{tpu_custom_call.1} parent=47 // pred_check
          %p355 = pneg %p176
        $region62: #{tpu_custom_call.1} parent=47 // pred_check_branch
          %357 = sbr.rel (%p355) target = $region64
        $region63: #{tpu_custom_call.1} parent=47 // pred_region
          %358 = dma.done [#allocation10], 256
        $region64: #{tpu_custom_call.1} parent=47 // pred_fallthru
          _
        // Predicated region
        $region65: #{tpu_custom_call.1} parent=47 // pred_check
          %p359 = pneg %p197
        $region66: #{tpu_custom_call.1} parent=47 // pred_check_branch
          %361 = sbr.rel (%p359) target = $region68
        $region67: #{tpu_custom_call.1} parent=47 // pred_region
          %362 = dma.done [#allocation10], 16
        $region68: #{tpu_custom_call.1} parent=47 // pred_fallthru
          _
        %s363 = sand.u32 %s48, 1
        %s364 = scalar_lea.sflag [#allocation4], %s363
        %s365 = sand.u32 %s48, 1
        %s366 = smul.addr %s365, 128
        %s367 = scalar_lea.vmem [#allocation3], %s366
        %p368 = pneg %p61
        %p369 = pneg %p58
        %s370 = smul.u32 16, %s31
        %p371 = scmp.lt.s32.totalorder %s370, 79
        %s372 = scalar_select %p371, %s370, 79
        %s373 = smul.addr %s372, 8
        %s374 = scalar_lea.vmem %s1, %s373
        %p375 = pneg %p87
        %p376 = pneg %p84
        %s377 = smul.u32 16, %s30
        %p378 = scmp.lt.s32.totalorder %s377, 79
        %s379 = scalar_select %p378, %s377, 79
        %s380 = smul.addr %s379, 8
        %s381 = scalar_lea.vmem %s2, %s380
        %p382 = pneg %p113
        %p383 = pneg %p110
        %p384 = pneg %p134
        %p385 = pneg %p131
        %p386 = pneg %p155
        %p387 = pneg %p152
        %p388 = pneg %p176
        %p389 = pneg %p173
        %p390 = pneg %p197
        %p391 = pneg %p194
        %p392 = pneg %p223
        %p393 = pneg %p220
        %s394 = sand.u32 %s210, 1
        %s395 = scalar_lea.sflag [#allocation5], %s394
        %s396 = sand.u32 %s210, 1
        %s397 = smul.addr %s396, 128
        %s398 = scalar_lea.vmem [#allocation12], %s397
        %s399 = smul.u32 16, %s30
        %s400 = smul.u32 16, %s31
        %p401 = scmp.lt.s32.totalorder %s400, 79
        %s402 = scalar_select %p401, %s400, 79
        %s403 = smul.addr %s402, 8
        %s404 = scalar_lea.vmem %s1, %s403
        %s405 = smul.u32 16, %s31
        %s406 = smul.u32 16, %s30
        %p407 = scmp.lt.s32.totalorder %s406, 79
        %s408 = scalar_select %p407, %s406, 79
        %s409 = smul.addr %s408, 8
        %s410 = scalar_lea.vmem %s2, %s409
        %s411 = smul.u32 16, %s30
        %s412 = smul.u32 16, %s30
        %p413 = scmp.eq.s32.totalorder %s31, 0
        // Predicated region
        $region69: #{tpu_custom_call.1} parent=47 // pred_check
          %p414 = pneg %p413
        $region70: #{tpu_custom_call.1} parent=47 // pred_check_branch
          %416 = sbr.rel (%p414) target = $region72
        $region71: #{tpu_custom_call.1} parent=47 // pred_region
          %vm417 = vcmask 261120
          %418 = vst.msk [vmem:[#allocation2] sm:$0xff] %vm417, 0.0
          %419 = vst.msk [vmem:[#allocation2 + $0x8] sm:$0xff] %vm417, 0.0
          %420 = vst.msk [vmem:[#allocation2 + $0x10] sm:$0xff] %vm417, 0.0
          %421 = vst.msk [vmem:[#allocation2 + $0x18] sm:$0xff] %vm417, 0.0
          %422 = vst.msk [vmem:[#allocation2 + $0x20] sm:$0xff] %vm417, 0.0
          %423 = vst.msk [vmem:[#allocation2 + $0x28] sm:$0xff] %vm417, 0.0
          %424 = vst.msk [vmem:[#allocation2 + $0x30] sm:$0xff] %vm417, 0.0
          %425 = vst.msk [vmem:[#allocation2 + $0x38] sm:$0xff] %vm417, 0.0
          %426 = vst.msk [vmem:[#allocation2 + $0x40] sm:$0xff] %vm417, 0.0
          %427 = vst.msk [vmem:[#allocation2 + $0x48] sm:$0xff] %vm417, 0.0
          %428 = vst.msk [vmem:[#allocation2 + $0x50] sm:$0xff] %vm417, 0.0
          %429 = vst.msk [vmem:[#allocation2 + $0x58] sm:$0xff] %vm417, 0.0
          %430 = vst.msk [vmem:[#allocation2 + $0x60] sm:$0xff] %vm417, 0.0
          %431 = vst.msk [vmem:[#allocation2 + $0x68] sm:$0xff] %vm417, 0.0
          %432 = vst.msk [vmem:[#allocation2 + $0x70] sm:$0xff] %vm417, 0.0
          %433 = vst.msk [vmem:[#allocation2 + $0x78] sm:$0xff] %vm417, 0.0
        $region72: #{tpu_custom_call.1} parent=47 // pred_fallthru
          _
        %v434 = vld [vmem:[#allocation2] sm:$0xff]
        %v435 = vld [vmem:[#allocation2 + $0x8] sm:$0xff]
        %v436 = vld [vmem:[#allocation2 + $0x10] sm:$0xff]
        %v437 = vld [vmem:[#allocation2 + $0x18] sm:$0xff]
        %v438 = vld [vmem:[#allocation2 + $0x20] sm:$0xff]
        %v439 = vld [vmem:[#allocation2 + $0x28] sm:$0xff]
        %v440 = vld [vmem:[#allocation2 + $0x30] sm:$0xff]
        %v441 = vld [vmem:[#allocation2 + $0x38] sm:$0xff]
        %v442 = vld [vmem:[#allocation2 + $0x40] sm:$0xff]
        %v443 = vld [vmem:[#allocation2 + $0x48] sm:$0xff]
        %v444 = vld [vmem:[#allocation2 + $0x50] sm:$0xff]
        %v445 = vld [vmem:[#allocation2 + $0x58] sm:$0xff]
        %v446 = vld [vmem:[#allocation2 + $0x60] sm:$0xff]
        %v447 = vld [vmem:[#allocation2 + $0x68] sm:$0xff]
        %v448 = vld [vmem:[#allocation2 + $0x70] sm:$0xff]
        %v449 = vld [vmem:[#allocation2 + $0x78] sm:$0xff]
        %v450 = vld [vmem:[%s342] sm:$0xff]
        %v451 = vld [vmem:[%s342 + $0x8] sm:$0xff]
        %v452 = vld [vmem:[%s342 + $0x10] sm:$0xff]
        %v453 = vld [vmem:[%s342 + $0x18] sm:$0xff]
        %v454 = vld [vmem:[%s342 + $0x20] sm:$0xff]
        %v455 = vld [vmem:[%s342 + $0x28] sm:$0xff]
        %v456 = vld [vmem:[%s342 + $0x30] sm:$0xff]
        %v457 = vld [vmem:[%s342 + $0x38] sm:$0xff]
        %v458 = vld [vmem:[%s342 + $0x40] sm:$0xff]
        %v459 = vld [vmem:[%s342 + $0x48] sm:$0xff]
        %v460 = vld [vmem:[%s342 + $0x50] sm:$0xff]
        %v461 = vld [vmem:[%s342 + $0x58] sm:$0xff]
        %v462 = vld [vmem:[%s342 + $0x60] sm:$0xff]
        %v463 = vld [vmem:[%s342 + $0x68] sm:$0xff]
        %v464 = vld [vmem:[%s342 + $0x70] sm:$0xff]
        %v465 = vld [vmem:[%s342 + $0x78] sm:$0xff]
        %v466 = vld [vmem:[%s404] sm:$0xff]
        %v467 = vld [vmem:[%s404 + $0x8] sm:$0xff]
        %v468 = vld [vmem:[%s404 + $0x10] sm:$0xff]
        %v469 = vld [vmem:[%s404 + $0x18] sm:$0xff]
        %v470 = vld [vmem:[%s404 + $0x20] sm:$0xff]
        %v471 = vld [vmem:[%s404 + $0x28] sm:$0xff]
        %v472 = vld [vmem:[%s404 + $0x30] sm:$0xff]
        %v473 = vld [vmem:[%s404 + $0x38] sm:$0xff]
        %v474 = vld [vmem:[%s404 + $0x40] sm:$0xff]
        %v475 = vld [vmem:[%s404 + $0x48] sm:$0xff]
        %v476 = vld [vmem:[%s404 + $0x50] sm:$0xff]
        %v477 = vld [vmem:[%s404 + $0x58] sm:$0xff]
        %v478 = vld [vmem:[%s404 + $0x60] sm:$0xff]
        %v479 = vld [vmem:[%s404 + $0x68] sm:$0xff]
        %v480 = vld [vmem:[%s404 + $0x70] sm:$0xff]
        %v481 = vld [vmem:[%s404 + $0x78] sm:$0xff]
        %482 = vmatprep.subr.mxu0 0.0
        %483 = vmatpush1.msra.mxu0 %v466
        %484 = vmatprep.subr.mxu0 0.0
        %485 = vmatpush1.msra.mxu0 %v467
        %486 = vmatprep.subr.mxu0 0.0
        %487 = vmatpush1.msra.mxu0 %v468
        %488 = vmatprep.subr.mxu0 0.0
        %489 = vmatpush1.msra.mxu0 %v469
        %490 = vmatprep.subr.mxu0 0.0
        %491 = vmatpush1.msra.mxu0 %v470
        %492 = vmatprep.subr.mxu0 0.0
        %493 = vmatpush1.msra.mxu0 %v471
        %494 = vmatprep.subr.mxu0 0.0
        %495 = vmatpush1.msra.mxu0 %v472
        %496 = vmatprep.subr.mxu0 0.0
        %497 = vmatpush1.msra.mxu0 %v473
        %498 = vmatprep.subr.mxu0 0.0
        %499 = vmatpush1.msra.mxu0 %v474
        %500 = vmatprep.subr.mxu0 0.0
        %501 = vmatpush1.msra.mxu0 %v475
        %502 = vmatprep.subr.mxu0 0.0
        %503 = vmatpush1.msra.mxu0 %v476
        %504 = vmatprep.subr.mxu0 0.0
        %505 = vmatpush1.msra.mxu0 %v477
        %506 = vmatprep.subr.mxu0 0.0
        %507 = vmatpush1.msra.mxu0 %v478
        %508 = vmatprep.subr.mxu0 0.0
        %509 = vmatpush1.msra.mxu0 %v479
        %510 = vmatprep.subr.mxu0 0.0
        %511 = vmatpush1.msra.mxu0 %v480
        %512 = vmatprep.subr.mxu0 0.0
        %513 = vmatpush1.msra.mxu0 %v481
        %514 = vmatprep.subr.mxu0 0.0
        %515 = vmatpush1.msra.mxu0 0.0
        %516 = vmatprep.subr.mxu0 0.0
        %517 = vmatpush1.msra.mxu0 0.0
        %518 = vmatprep.subr.mxu0 0.0
        %519 = vmatpush1.msra.mxu0 0.0
        %520 = vmatprep.subr.mxu0 0.0
        %521 = vmatpush1.msra.mxu0 0.0
        %522 = vmatprep.subr.mxu0 0.0
        %523 = vmatpush1.msra.mxu0 0.0
        %524 = vmatprep.subr.mxu0 0.0
        %525 = vmatpush1.msra.mxu0 0.0
        %526 = vmatprep.subr.mxu0 0.0
        %527 = vmatpush1.msra.mxu0 0.0
        %528 = vmatprep.subr.mxu0 0.0
        %529 = vmatpush1.msra.mxu0 0.0
        %530 = vmatprep.subr.mxu0 0.0
        %531 = vmatpush1.msra.mxu0 0.0
        %532 = vmatprep.subr.mxu0 0.0
        %533 = vmatpush1.msra.mxu0 0.0
        %534 = vmatprep.subr.mxu0 0.0
        %535 = vmatpush1.msra.mxu0 0.0
        %536 = vmatprep.subr.mxu0 0.0
        %537 = vmatpush1.msra.mxu0 0.0
        %538 = vmatprep.subr.mxu0 0.0
        %539 = vmatpush1.msra.mxu0 0.0
        %540 = vmatprep.subr.mxu0 0.0
        %541 = vmatpush1.msra.mxu0 0.0
        %542 = vmatprep.subr.mxu0 0.0
        %543 = vmatpush1.msra.mxu0 0.0
        %544 = vmatprep.subr.mxu0 0.0
        %545 = vmatpush1.msra.mxu0 0.0
        %546 = vmatprep.mubr.f32.mxu0 0.0
        %547 = vmatmul.mubr.f32.gmra.mrb[0].mxu0 %v450
        %v548 = vpop.f32.mrb[0].mxu0
        %v549 = vadd.f32 0.0, %v548
        %v550 = vpop.f32.mrb[0].mxu0
        %551 = vmatprep.mubr.f32.mxu0 0.0
        %552 = vmatmul.mubr.f32.gmra.mrb[0].mxu0 %v451
        %v553 = vpop.f32.mrb[0].mxu0
        %v554 = vadd.f32 0.0, %v553
        %v555 = vpop.f32.mrb[0].mxu0
        %556 = vmatprep.mubr.f32.mxu0 0.0
        %557 = vmatmul.mubr.f32.gmra.mrb[0].mxu0 %v452
        %v558 = vpop.f32.mrb[0].mxu0
        %v559 = vadd.f32 0.0, %v558
        %v560 = vpop.f32.mrb[0].mxu0
        %561 = vmatprep.mubr.f32.mxu0 0.0
        %562 = vmatmul.mubr.f32.gmra.mrb[0].mxu0 %v453
        %v563 = vpop.f32.mrb[0].mxu0
        %v564 = vadd.f32 0.0, %v563
        %v565 = vpop.f32.mrb[0].mxu0
        %566 = vmatprep.mubr.f32.mxu0 0.0
        %567 = vmatmul.mubr.f32.gmra.mrb[0].mxu0 %v454
        %v568 = vpop.f32.mrb[0].mxu0
        %v569 = vadd.f32 0.0, %v568
        %v570 = vpop.f32.mrb[0].mxu0
        %571 = vmatprep.mubr.f32.mxu0 0.0
        %572 = vmatmul.mubr.f32.gmra.mrb[0].mxu0 %v455
        %v573 = vpop.f32.mrb[0].mxu0
        %v574 = vadd.f32 0.0, %v573
        %v575 = vpop.f32.mrb[0].mxu0
        %576 = vmatprep.mubr.f32.mxu0 0.0
        %577 = vmatmul.mubr.f32.gmra.mrb[0].mxu0 %v456
        %v578 = vpop.f32.mrb[0].mxu0
        %v579 = vadd.f32 0.0, %v578
        %v580 = vpop.f32.mrb[0].mxu0
        %581 = vmatprep.mubr.f32.mxu0 0.0
        %582 = vmatmul.mubr.f32.gmra.mrb[0].mxu0 %v457
        %v583 = vpop.f32.mrb[0].mxu0
        %v584 = vadd.f32 0.0, %v583
        %v585 = vpop.f32.mrb[0].mxu0
        %586 = vmatprep.mubr.f32.mxu0 0.0
        %587 = vmatmul.mubr.f32.gmra.mrb[0].mxu0 %v458
        %v588 = vpop.f32.mrb[0].mxu0
        %v589 = vadd.f32 0.0, %v588
        %v590 = vpop.f32.mrb[0].mxu0
        %591 = vmatprep.mubr.f32.mxu0 0.0
        %592 = vmatmul.mubr.f32.gmra.mrb[0].mxu0 %v459
        %v593 = vpop.f32.mrb[0].mxu0
        %v594 = vadd.f32 0.0, %v593
        %v595 = vpop.f32.mrb[0].mxu0
        %596 = vmatprep.mubr.f32.mxu0 0.0
        %597 = vmatmul.mubr.f32.gmra.mrb[0].mxu0 %v460
        %v598 = vpop.f32.mrb[0].mxu0
        %v599 = vadd.f32 0.0, %v598
        %v600 = vpop.f32.mrb[0].mxu0
        %601 = vmatprep.mubr.f32.mxu0 0.0
        %602 = vmatmul.mubr.f32.gmra.mrb[0].mxu0 %v461
        %v603 = vpop.f32.mrb[0].mxu0
        %v604 = vadd.f32 0.0, %v603
        %v605 = vpop.f32.mrb[0].mxu0
        %606 = vmatprep.mubr.f32.mxu0 0.0
        %607 = vmatmul.mubr.f32.gmra.mrb[0].mxu0 %v462
        %v608 = vpop.f32.mrb[0].mxu0
        %v609 = vadd.f32 0.0, %v608
        %v610 = vpop.f32.mrb[0].mxu0
        %611 = vmatprep.mubr.f32.mxu0 0.0
        %612 = vmatmul.mubr.f32.gmra.mrb[0].mxu0 %v463
        %v613 = vpop.f32.mrb[0].mxu0
        %v614 = vadd.f32 0.0, %v613
        %v615 = vpop.f32.mrb[0].mxu0
        %616 = vmatprep.mubr.f32.mxu0 0.0
        %617 = vmatmul.mubr.f32.gmra.mrb[0].mxu0 %v464
        %v618 = vpop.f32.mrb[0].mxu0
        %v619 = vadd.f32 0.0, %v618
        %v620 = vpop.f32.mrb[0].mxu0
        %621 = vmatprep.mubr.f32.mxu0 0.0
        %622 = vmatmul.mubr.f32.gmra.mrb[0].mxu0 %v465
        %v623 = vpop.f32.mrb[0].mxu0
        %v624 = vadd.f32 0.0, %v623
        %v625 = vpop.f32.mrb[0].mxu0
        %626 = vdwg.mxu0
        %v627 = vadd.f32 %v434, %v549
        %v628 = vadd.f32 %v435, %v554
        %v629 = vadd.f32 %v436, %v559
        %v630 = vadd.f32 %v437, %v564
        %v631 = vadd.f32 %v438, %v569
        %v632 = vadd.f32 %v439, %v574
        %v633 = vadd.f32 %v440, %v579
        %v634 = vadd.f32 %v441, %v584
        %v635 = vadd.f32 %v442, %v589
        %v636 = vadd.f32 %v443, %v594
        %v637 = vadd.f32 %v444, %v599
        %v638 = vadd.f32 %v445, %v604
        %v639 = vadd.f32 %v446, %v609
        %v640 = vadd.f32 %v447, %v614
        %v641 = vadd.f32 %v448, %v619
        %v642 = vadd.f32 %v449, %v624
        %vm643 = vcmask 261120
        %644 = vst.msk [vmem:[#allocation2] sm:$0xff] %vm643, %v627
        %645 = vst.msk [vmem:[#allocation2 + $0x8] sm:$0xff] %vm643, %v628
        %646 = vst.msk [vmem:[#allocation2 + $0x10] sm:$0xff] %vm643, %v629
        %647 = vst.msk [vmem:[#allocation2 + $0x18] sm:$0xff] %vm643, %v630
        %648 = vst.msk [vmem:[#allocation2 + $0x20] sm:$0xff] %vm643, %v631
        %649 = vst.msk [vmem:[#allocation2 + $0x28] sm:$0xff] %vm643, %v632
        %650 = vst.msk [vmem:[#allocation2 + $0x30] sm:$0xff] %vm643, %v633
        %651 = vst.msk [vmem:[#allocation2 + $0x38] sm:$0xff] %vm643, %v634
        %652 = vst.msk [vmem:[#allocation2 + $0x40] sm:$0xff] %vm643, %v635
        %653 = vst.msk [vmem:[#allocation2 + $0x48] sm:$0xff] %vm643, %v636
        %654 = vst.msk [vmem:[#allocation2 + $0x50] sm:$0xff] %vm643, %v637
        %655 = vst.msk [vmem:[#allocation2 + $0x58] sm:$0xff] %vm643, %v638
        %656 = vst.msk [vmem:[#allocation2 + $0x60] sm:$0xff] %vm643, %v639
        %657 = vst.msk [vmem:[#allocation2 + $0x68] sm:$0xff] %vm643, %v640
        %658 = vst.msk [vmem:[#allocation2 + $0x70] sm:$0xff] %vm643, %v641
        %659 = vst.msk [vmem:[#allocation2 + $0x78] sm:$0xff] %vm643, %v642
        %p660 = scmp.eq.s32.totalorder %s31, 4
        // Predicated region
        $region73: #{tpu_custom_call.1} parent=47 // pred_check
          %p661 = pneg %p660
        $region74: #{tpu_custom_call.1} parent=47 // pred_check_branch
          %663 = sbr.rel (%p661) target = $region76
        $region75: #{tpu_custom_call.1} parent=47 // pred_region
          %v664 = vld [vmem:[#allocation2] sm:$0xff]
          %v665 = vld [vmem:[#allocation2 + $0x8] sm:$0xff]
          %v666 = vld [vmem:[#allocation2 + $0x10] sm:$0xff]
          %v667 = vld [vmem:[#allocation2 + $0x18] sm:$0xff]
          %v668 = vld [vmem:[#allocation2 + $0x20] sm:$0xff]
          %v669 = vld [vmem:[#allocation2 + $0x28] sm:$0xff]
          %v670 = vld [vmem:[#allocation2 + $0x30] sm:$0xff]
          %v671 = vld [vmem:[#allocation2 + $0x38] sm:$0xff]
          %v672 = vld [vmem:[#allocation2 + $0x40] sm:$0xff]
          %v673 = vld [vmem:[#allocation2 + $0x48] sm:$0xff]
          %v674 = vld [vmem:[#allocation2 + $0x50] sm:$0xff]
          %v675 = vld [vmem:[#allocation2 + $0x58] sm:$0xff]
          %v676 = vld [vmem:[#allocation2 + $0x60] sm:$0xff]
          %v677 = vld [vmem:[#allocation2 + $0x68] sm:$0xff]
          %v678 = vld [vmem:[#allocation2 + $0x70] sm:$0xff]
          %v679 = vld [vmem:[#allocation2 + $0x78] sm:$0xff]
          %v680 = vld [vmem:[#allocation6] sm:$0x1]
          %v682 = vlaneseq
          %v683 = vshrl.u32 %v682, 7
          %v684 = vsub.s32 0, %v683
          %v685 = vrot.slane %v680, %v684
          %v687 = vadd.f32 %v664, %v685
          %v688 = vadd.f32 %v665, %v685
          %v689 = vadd.f32 %v666, %v685
          %v690 = vadd.f32 %v667, %v685
          %v691 = vadd.f32 %v668, %v685
          %v692 = vadd.f32 %v669, %v685
          %v693 = vadd.f32 %v670, %v685
          %v694 = vadd.f32 %v671, %v685
          %v695 = vadd.f32 %v672, %v685
          %v696 = vadd.f32 %v673, %v685
          %v697 = vadd.f32 %v674, %v685
          %v698 = vadd.f32 %v675, %v685
          %v699 = vadd.f32 %v676, %v685
          %v700 = vadd.f32 %v677, %v685
          %v701 = vadd.f32 %v678, %v685
          %v702 = vadd.f32 %v679, %v685
          %v703 = vmax.f32 %v687, 0.0
          %v704 = vmax.f32 %v688, 0.0
          %v705 = vmax.f32 %v689, 0.0
          %v706 = vmax.f32 %v690, 0.0
          %v707 = vmax.f32 %v691, 0.0
          %v708 = vmax.f32 %v692, 0.0
          %v709 = vmax.f32 %v693, 0.0
          %v710 = vmax.f32 %v694, 0.0
          %v711 = vmax.f32 %v695, 0.0
          %v712 = vmax.f32 %v696, 0.0
          %v713 = vmax.f32 %v697, 0.0
          %v714 = vmax.f32 %v698, 0.0
          %v715 = vmax.f32 %v699, 0.0
          %v716 = vmax.f32 %v700, 0.0
          %v717 = vmax.f32 %v701, 0.0
          %v718 = vmax.f32 %v702, 0.0
          %v719 = vld [vmem:[#allocation8] sm:$0xff]
          %v720 = vld [vmem:[#allocation8 + $0x8] sm:$0xff]
          %v721 = vld [vmem:[#allocation8 + $0x10] sm:$0xff]
          %v722 = vld [vmem:[#allocation8 + $0x18] sm:$0xff]
          %v723 = vld [vmem:[%s410] sm:$0xff]
          %v724 = vld [vmem:[%s410 + $0x8] sm:$0xff]
          %v725 = vld [vmem:[%s410 + $0x10] sm:$0xff]
          %v726 = vld [vmem:[%s410 + $0x18] sm:$0xff]
          %v727 = vld [vmem:[%s410 + $0x20] sm:$0xff]
          %v728 = vld [vmem:[%s410 + $0x28] sm:$0xff]
          %v729 = vld [vmem:[%s410 + $0x30] sm:$0xff]
          %v730 = vld [vmem:[%s410 + $0x38] sm:$0xff]
          %v731 = vld [vmem:[%s410 + $0x40] sm:$0xff]
          %v732 = vld [vmem:[%s410 + $0x48] sm:$0xff]
          %v733 = vld [vmem:[%s410 + $0x50] sm:$0xff]
          %v734 = vld [vmem:[%s410 + $0x58] sm:$0xff]
          %v735 = vld [vmem:[%s410 + $0x60] sm:$0xff]
          %v736 = vld [vmem:[%s410 + $0x68] sm:$0xff]
          %v737 = vld [vmem:[%s410 + $0x70] sm:$0xff]
          %v738 = vld [vmem:[%s410 + $0x78] sm:$0xff]
          %v739 = vld [vmem:[#allocation9] sm:$0xff]
          %v740 = vld [vmem:[#allocation9 + $0x8] sm:$0xff]
          %vm741 = vcmask 130048
          %v743 = vsel %vm741, %v723, 0
          %v746 = vsel %vm741, %v724, 0
          %v749 = vsel %vm741, %v725, 0
          %v752 = vsel %vm741, %v726, 0
          %v755 = vsel %vm741, %v727, 0
          %v758 = vsel %vm741, %v728, 0
          %v761 = vsel %vm741, %v729, 0
          %v764 = vsel %vm741, %v730, 0
          %v767 = vsel %vm741, %v731, 0
          %v770 = vsel %vm741, %v732, 0
          %v773 = vsel %vm741, %v733, 0
          %v776 = vsel %vm741, %v734, 0
          %v779 = vsel %vm741, %v735, 0
          %v782 = vsel %vm741, %v736, 0
          %v785 = vsel %vm741, %v737, 0
          %v788 = vsel %vm741, %v738, 0
          %790 = vmatprep.subr.mxu0 0.0
          %791 = vmatpush1.msra.mxu0 %v739
          %792 = vmatprep.subr.mxu0 0.0
          %793 = vmatpush1.msra.mxu0 %v740
          %794 = vmatprep.subr.mxu0 0.0
          %795 = vmatpush1.msra.mxu0 0.0
          %796 = vmatprep.subr.mxu0 0.0
          %797 = vmatpush1.msra.mxu0 0.0
          %798 = vmatprep.subr.mxu0 0.0
          %799 = vmatpush1.msra.mxu0 0.0
          %800 = vmatprep.subr.mxu0 0.0
          %801 = vmatpush1.msra.mxu0 0.0
          %802 = vmatprep.subr.mxu0 0.0
          %803 = vmatpush1.msra.mxu0 0.0
          %804 = vmatprep.subr.mxu0 0.0
          %805 = vmatpush1.msra.mxu0 0.0
          %806 = vmatprep.subr.mxu0 0.0
          %807 = vmatpush1.msra.mxu0 0.0
          %808 = vmatprep.subr.mxu0 0.0
          %809 = vmatpush1.msra.mxu0 0.0
          %810 = vmatprep.subr.mxu0 0.0
          %811 = vmatpush1.msra.mxu0 0.0
          %812 = vmatprep.subr.mxu0 0.0
          %813 = vmatpush1.msra.mxu0 0.0
          %814 = vmatprep.subr.mxu0 0.0
          %815 = vmatpush1.msra.mxu0 0.0
          %816 = vmatprep.subr.mxu0 0.0
          %817 = vmatpush1.msra.mxu0 0.0
          %818 = vmatprep.subr.mxu0 0.0
          %819 = vmatpush1.msra.mxu0 0.0
          %820 = vmatprep.subr.mxu0 0.0
          %821 = vmatpush1.msra.mxu0 0.0
          %822 = vmatprep.subr.mxu0 0.0
          %823 = vmatpush1.msra.mxu0 0.0
          %824 = vmatprep.subr.mxu0 0.0
          %825 = vmatpush1.msra.mxu0 0.0
          %826 = vmatprep.subr.mxu0 0.0
          %827 = vmatpush1.msra.mxu0 0.0
          %828 = vmatprep.subr.mxu0 0.0
          %829 = vmatpush1.msra.mxu0 0.0
          %830 = vmatprep.subr.mxu0 0.0
          %831 = vmatpush1.msra.mxu0 0.0
          %832 = vmatprep.subr.mxu0 0.0
          %833 = vmatpush1.msra.mxu0 0.0
          %834 = vmatprep.subr.mxu0 0.0
          %835 = vmatpush1.msra.mxu0 0.0
          %836 = vmatprep.subr.mxu0 0.0
          %837 = vmatpush1.msra.mxu0 0.0
          %838 = vmatprep.subr.mxu0 0.0
          %839 = vmatpush1.msra.mxu0 0.0
          %840 = vmatprep.subr.mxu0 0.0
          %841 = vmatpush1.msra.mxu0 0.0
          %842 = vmatprep.subr.mxu0 0.0
          %843 = vmatpush1.msra.mxu0 0.0
          %844 = vmatprep.subr.mxu0 0.0
          %845 = vmatpush1.msra.mxu0 0.0
          %846 = vmatprep.subr.mxu0 0.0
          %847 = vmatpush1.msra.mxu0 0.0
          %848 = vmatprep.subr.mxu0 0.0
          %849 = vmatpush1.msra.mxu0 0.0
          %850 = vmatprep.subr.mxu0 0.0
          %851 = vmatpush1.msra.mxu0 0.0
          %852 = vmatprep.subr.mxu0 0.0
          %853 = vmatpush1.msra.mxu0 0.0
          %854 = vmatprep.mubr.f32.mxu0 0.0
          %855 = vmatmul.mubr.f32.gmra.mrb[0].mxu0 %v743
          %v856 = vpop.f32.mrb[0].mxu0
          %v857 = vadd.f32 0.0, %v856
          %v858 = vpop.f32.mrb[0].mxu0
          %859 = vmatprep.mubr.f32.mxu0 0.0
          %860 = vmatmul.mubr.f32.gmra.mrb[0].mxu0 %v746
          %v861 = vpop.f32.mrb[0].mxu0
          %v862 = vadd.f32 0.0, %v861
          %v863 = vpop.f32.mrb[0].mxu0
          %864 = vmatprep.mubr.f32.mxu0 0.0
          %865 = vmatmul.mubr.f32.gmra.mrb[0].mxu0 %v749
          %v866 = vpop.f32.mrb[0].mxu0
          %v867 = vadd.f32 0.0, %v866
          %v868 = vpop.f32.mrb[0].mxu0
          %869 = vmatprep.mubr.f32.mxu0 0.0
          %870 = vmatmul.mubr.f32.gmra.mrb[0].mxu0 %v752
          %v871 = vpop.f32.mrb[0].mxu0
          %v872 = vadd.f32 0.0, %v871
          %v873 = vpop.f32.mrb[0].mxu0
          %874 = vmatprep.mubr.f32.mxu0 0.0
          %875 = vmatmul.mubr.f32.gmra.mrb[0].mxu0 %v755
          %v876 = vpop.f32.mrb[0].mxu0
          %v877 = vadd.f32 0.0, %v876
          %v878 = vpop.f32.mrb[0].mxu0
          %879 = vmatprep.mubr.f32.mxu0 0.0
          %880 = vmatmul.mubr.f32.gmra.mrb[0].mxu0 %v758
          %v881 = vpop.f32.mrb[0].mxu0
          %v882 = vadd.f32 0.0, %v881
          %v883 = vpop.f32.mrb[0].mxu0
          %884 = vmatprep.mubr.f32.mxu0 0.0
          %885 = vmatmul.mubr.f32.gmra.mrb[0].mxu0 %v761
          %v886 = vpop.f32.mrb[0].mxu0
          %v887 = vadd.f32 0.0, %v886
          %v888 = vpop.f32.mrb[0].mxu0
          %889 = vmatprep.mubr.f32.mxu0 0.0
          %890 = vmatmul.mubr.f32.gmra.mrb[0].mxu0 %v764
          %v891 = vpop.f32.mrb[0].mxu0
          %v892 = vadd.f32 0.0, %v891
          %v893 = vpop.f32.mrb[0].mxu0
          %894 = vmatprep.mubr.f32.mxu0 0.0
          %895 = vmatmul.mubr.f32.gmra.mrb[0].mxu0 %v767
          %v896 = vpop.f32.mrb[0].mxu0
          %v897 = vadd.f32 0.0, %v896
          %v898 = vpop.f32.mrb[0].mxu0
          %899 = vmatprep.mubr.f32.mxu0 0.0
          %900 = vmatmul.mubr.f32.gmra.mrb[0].mxu0 %v770
          %v901 = vpop.f32.mrb[0].mxu0
          %v902 = vadd.f32 0.0, %v901
          %v903 = vpop.f32.mrb[0].mxu0
          %904 = vmatprep.mubr.f32.mxu0 0.0
          %905 = vmatmul.mubr.f32.gmra.mrb[0].mxu0 %v773
          %v906 = vpop.f32.mrb[0].mxu0
          %v907 = vadd.f32 0.0, %v906
          %v908 = vpop.f32.mrb[0].mxu0
          %909 = vmatprep.mubr.f32.mxu0 0.0
          %910 = vmatmul.mubr.f32.gmra.mrb[0].mxu0 %v776
          %v911 = vpop.f32.mrb[0].mxu0
          %v912 = vadd.f32 0.0, %v911
          %v913 = vpop.f32.mrb[0].mxu0
          %914 = vmatprep.mubr.f32.mxu0 0.0
          %915 = vmatmul.mubr.f32.gmra.mrb[0].mxu0 %v779
          %v916 = vpop.f32.mrb[0].mxu0
          %v917 = vadd.f32 0.0, %v916
          %v918 = vpop.f32.mrb[0].mxu0
          %919 = vmatprep.mubr.f32.mxu0 0.0
          %920 = vmatmul.mubr.f32.gmra.mrb[0].mxu0 %v782
          %v921 = vpop.f32.mrb[0].mxu0
          %v922 = vadd.f32 0.0, %v921
          %v923 = vpop.f32.mrb[0].mxu0
          %924 = vmatprep.mubr.f32.mxu0 0.0
          %925 = vmatmul.mubr.f32.gmra.mrb[0].mxu0 %v785
          %v926 = vpop.f32.mrb[0].mxu0
          %v927 = vadd.f32 0.0, %v926
          %v928 = vpop.f32.mrb[0].mxu0
          %929 = vmatprep.mubr.f32.mxu0 0.0
          %930 = vmatmul.mubr.f32.gmra.mrb[0].mxu0 %v788
          %v931 = vpop.f32.mrb[0].mxu0
          %v932 = vadd.f32 0.0, %v931
          %v933 = vpop.f32.mrb[0].mxu0
          %934 = vdwg.mxu0
          %v936 = vsel %vm643, %v703, 0
          %v939 = vsel %vm643, %v704, 0
          %v942 = vsel %vm643, %v705, 0
          %v945 = vsel %vm643, %v706, 0
          %v948 = vsel %vm643, %v707, 0
          %v951 = vsel %vm643, %v708, 0
          %v954 = vsel %vm643, %v709, 0
          %v957 = vsel %vm643, %v710, 0
          %v960 = vsel %vm643, %v711, 0
          %v963 = vsel %vm643, %v712, 0
          %v966 = vsel %vm643, %v713, 0
          %v969 = vsel %vm643, %v714, 0
          %v972 = vsel %vm643, %v715, 0
          %v975 = vsel %vm643, %v716, 0
          %v978 = vsel %vm643, %v717, 0
          %v981 = vsel %vm643, %v718, 0
          %983 = vmatprep.subr.mxu0 0.0
          %984 = vmatpush1.msra.mxu0 %v719
          %985 = vmatprep.subr.mxu0 0.0
          %986 = vmatpush1.msra.mxu0 %v720
          %987 = vmatprep.subr.mxu0 0.0
          %988 = vmatpush1.msra.mxu0 %v721
          %989 = vmatprep.subr.mxu0 0.0
          %990 = vmatpush1.msra.mxu0 %v722
          %991 = vmatprep.subr.mxu0 0.0
          %992 = vmatpush1.msra.mxu0 0.0
          %993 = vmatprep.subr.mxu0 0.0
          %994 = vmatpush1.msra.mxu0 0.0
          %995 = vmatprep.subr.mxu0 0.0
          %996 = vmatpush1.msra.mxu0 0.0
          %997 = vmatprep.subr.mxu0 0.0
          %998 = vmatpush1.msra.mxu0 0.0
          %999 = vmatprep.subr.mxu0 0.0
          %1000 = vmatpush1.msra.mxu0 0.0
          %1001 = vmatprep.subr.mxu0 0.0
          %1002 = vmatpush1.msra.mxu0 0.0
          %1003 = vmatprep.subr.mxu0 0.0
          %1004 = vmatpush1.msra.mxu0 0.0
          %1005 = vmatprep.subr.mxu0 0.0
          %1006 = vmatpush1.msra.mxu0 0.0
          %1007 = vmatprep.subr.mxu0 0.0
          %1008 = vmatpush1.msra.mxu0 0.0
          %1009 = vmatprep.subr.mxu0 0.0
          %1010 = vmatpush1.msra.mxu0 0.0
          %1011 = vmatprep.subr.mxu0 0.0
          %1012 = vmatpush1.msra.mxu0 0.0
          %1013 = vmatprep.subr.mxu0 0.0
          %1014 = vmatpush1.msra.mxu0 0.0
          %1015 = vmatprep.subr.mxu0 0.0
          %1016 = vmatpush1.msra.mxu0 0.0
          %1017 = vmatprep.subr.mxu0 0.0
          %1018 = vmatpush1.msra.mxu0 0.0
          %1019 = vmatprep.subr.mxu0 0.0
          %1020 = vmatpush1.msra.mxu0 0.0
          %1021 = vmatprep.subr.mxu0 0.0
          %1022 = vmatpush1.msra.mxu0 0.0
          %1023 = vmatprep.subr.mxu0 0.0
          %1024 = vmatpush1.msra.mxu0 0.0
          %1025 = vmatprep.subr.mxu0 0.0
          %1026 = vmatpush1.msra.mxu0 0.0
          %1027 = vmatprep.subr.mxu0 0.0
          %1028 = vmatpush1.msra.mxu0 0.0
          %1029 = vmatprep.subr.mxu0 0.0
          %1030 = vmatpush1.msra.mxu0 0.0
          %1031 = vmatprep.subr.mxu0 0.0
          %1032 = vmatpush1.msra.mxu0 0.0
          %1033 = vmatprep.subr.mxu0 0.0
          %1034 = vmatpush1.msra.mxu0 0.0
          %1035 = vmatprep.subr.mxu0 0.0
          %1036 = vmatpush1.msra.mxu0 0.0
          %1037 = vmatprep.subr.mxu0 0.0
          %1038 = vmatpush1.msra.mxu0 0.0
          %1039 = vmatprep.subr.mxu0 0.0
          %1040 = vmatpush1.msra.mxu0 0.0
          %1041 = vmatprep.subr.mxu0 0.0
          %1042 = vmatpush1.msra.mxu0 0.0
          %1043 = vmatprep.subr.mxu0 0.0
          %1044 = vmatpush1.msra.mxu0 0.0
          %1045 = vmatprep.subr.mxu0 0.0
          %1046 = vmatpush1.msra.mxu0 0.0
          %1047 = vmatprep.mubr.f32.mxu0 0.0
          %1048 = vmatmul.mubr.f32.gmra.mrb[0].mxu0 %v936
          %v1049 = vpop.f32.mrb[0].mxu0
          %v1050 = vadd.f32 %v857, %v1049
          %v1051 = vpop.f32.mrb[0].mxu0
          %1052 = vmatprep.mubr.f32.mxu0 0.0
          %1053 = vmatmul.mubr.f32.gmra.mrb[0].mxu0 %v939
          %v1054 = vpop.f32.mrb[0].mxu0
          %v1055 = vadd.f32 %v862, %v1054
          %v1056 = vpop.f32.mrb[0].mxu0
          %1057 = vmatprep.mubr.f32.mxu0 0.0
          %1058 = vmatmul.mubr.f32.gmra.mrb[0].mxu0 %v942
          %v1059 = vpop.f32.mrb[0].mxu0
          %v1060 = vadd.f32 %v867, %v1059
          %v1061 = vpop.f32.mrb[0].mxu0
          %1062 = vmatprep.mubr.f32.mxu0 0.0
          %1063 = vmatmul.mubr.f32.gmra.mrb[0].mxu0 %v945
          %v1064 = vpop.f32.mrb[0].mxu0
          %v1065 = vadd.f32 %v872, %v1064
          %v1066 = vpop.f32.mrb[0].mxu0
          %1067 = vmatprep.mubr.f32.mxu0 0.0
          %1068 = vmatmul.mubr.f32.gmra.mrb[0].mxu0 %v948
          %v1069 = vpop.f32.mrb[0].mxu0
          %v1070 = vadd.f32 %v877, %v1069
          %v1071 = vpop.f32.mrb[0].mxu0
          %1072 = vmatprep.mubr.f32.mxu0 0.0
          %1073 = vmatmul.mubr.f32.gmra.mrb[0].mxu0 %v951
          %v1074 = vpop.f32.mrb[0].mxu0
          %v1075 = vadd.f32 %v882, %v1074
          %v1076 = vpop.f32.mrb[0].mxu0
          %1077 = vmatprep.mubr.f32.mxu0 0.0
          %1078 = vmatmul.mubr.f32.gmra.mrb[0].mxu0 %v954
          %v1079 = vpop.f32.mrb[0].mxu0
          %v1080 = vadd.f32 %v887, %v1079
          %v1081 = vpop.f32.mrb[0].mxu0
          %1082 = vmatprep.mubr.f32.mxu0 0.0
          %1083 = vmatmul.mubr.f32.gmra.mrb[0].mxu0 %v957
          %v1084 = vpop.f32.mrb[0].mxu0
          %v1085 = vadd.f32 %v892, %v1084
          %v1086 = vpop.f32.mrb[0].mxu0
          %1087 = vmatprep.mubr.f32.mxu0 0.0
          %1088 = vmatmul.mubr.f32.gmra.mrb[0].mxu0 %v960
          %v1089 = vpop.f32.mrb[0].mxu0
          %v1090 = vadd.f32 %v897, %v1089
          %v1091 = vpop.f32.mrb[0].mxu0
          %1092 = vmatprep.mubr.f32.mxu0 0.0
          %1093 = vmatmul.mubr.f32.gmra.mrb[0].mxu0 %v963
          %v1094 = vpop.f32.mrb[0].mxu0
          %v1095 = vadd.f32 %v902, %v1094
          %v1096 = vpop.f32.mrb[0].mxu0
          %1097 = vmatprep.mubr.f32.mxu0 0.0
          %1098 = vmatmul.mubr.f32.gmra.mrb[0].mxu0 %v966
          %v1099 = vpop.f32.mrb[0].mxu0
          %v1100 = vadd.f32 %v907, %v1099
          %v1101 = vpop.f32.mrb[0].mxu0
          %1102 = vmatprep.mubr.f32.mxu0 0.0
          %1103 = vmatmul.mubr.f32.gmra.mrb[0].mxu0 %v969
          %v1104 = vpop.f32.mrb[0].mxu0
          %v1105 = vadd.f32 %v912, %v1104
          %v1106 = vpop.f32.mrb[0].mxu0
          %1107 = vmatprep.mubr.f32.mxu0 0.0
          %1108 = vmatmul.mubr.f32.gmra.mrb[0].mxu0 %v972
          %v1109 = vpop.f32.mrb[0].mxu0
          %v1110 = vadd.f32 %v917, %v1109
          %v1111 = vpop.f32.mrb[0].mxu0
          %1112 = vmatprep.mubr.f32.mxu0 0.0
          %1113 = vmatmul.mubr.f32.gmra.mrb[0].mxu0 %v975
          %v1114 = vpop.f32.mrb[0].mxu0
          %v1115 = vadd.f32 %v922, %v1114
          %v1116 = vpop.f32.mrb[0].mxu0
          %1117 = vmatprep.mubr.f32.mxu0 0.0
          %1118 = vmatmul.mubr.f32.gmra.mrb[0].mxu0 %v978
          %v1119 = vpop.f32.mrb[0].mxu0
          %v1120 = vadd.f32 %v927, %v1119
          %v1121 = vpop.f32.mrb[0].mxu0
          %1122 = vmatprep.mubr.f32.mxu0 0.0
          %1123 = vmatmul.mubr.f32.gmra.mrb[0].mxu0 %v981
          %v1124 = vpop.f32.mrb[0].mxu0
          %v1125 = vadd.f32 %v932, %v1124
          %v1126 = vpop.f32.mrb[0].mxu0
          %1127 = vdwg.mxu0
          %v1128 = vld [vmem:[#allocation11] sm:$0x1]
          %v1130 = vlaneseq
          %v1131 = vshrl.u32 %v1130, 7
          %v1132 = vsub.s32 0, %v1131
          %v1133 = vrot.slane %v1128, %v1132
          %v1135 = vadd.f32 %v1050, %v1133
          %v1136 = vadd.f32 %v1055, %v1133
          %v1137 = vadd.f32 %v1060, %v1133
          %v1138 = vadd.f32 %v1065, %v1133
          %v1139 = vadd.f32 %v1070, %v1133
          %v1140 = vadd.f32 %v1075, %v1133
          %v1141 = vadd.f32 %v1080, %v1133
          %v1142 = vadd.f32 %v1085, %v1133
          %v1143 = vadd.f32 %v1090, %v1133
          %v1144 = vadd.f32 %v1095, %v1133
          %v1145 = vadd.f32 %v1100, %v1133
          %v1146 = vadd.f32 %v1105, %v1133
          %v1147 = vadd.f32 %v1110, %v1133
          %v1148 = vadd.f32 %v1115, %v1133
          %v1149 = vadd.f32 %v1120, %v1133
          %v1150 = vadd.f32 %v1125, %v1133
          %1151 = vst [vmem:[%s398] sm:$0xff] %v1135
          %1152 = vst [vmem:[%s398 + $0x8] sm:$0xff] %v1136
          %1153 = vst [vmem:[%s398 + $0x10] sm:$0xff] %v1137
          %1154 = vst [vmem:[%s398 + $0x18] sm:$0xff] %v1138
          %1155 = vst [vmem:[%s398 + $0x20] sm:$0xff] %v1139
          %1156 = vst [vmem:[%s398 + $0x28] sm:$0xff] %v1140
          %1157 = vst [vmem:[%s398 + $0x30] sm:$0xff] %v1141
          %1158 = vst [vmem:[%s398 + $0x38] sm:$0xff] %v1142
          %1159 = vst [vmem:[%s398 + $0x40] sm:$0xff] %v1143
          %1160 = vst [vmem:[%s398 + $0x48] sm:$0xff] %v1144
          %1161 = vst [vmem:[%s398 + $0x50] sm:$0xff] %v1145
          %1162 = vst [vmem:[%s398 + $0x58] sm:$0xff] %v1146
          %1163 = vst [vmem:[%s398 + $0x60] sm:$0xff] %v1147
          %1164 = vst [vmem:[%s398 + $0x68] sm:$0xff] %v1148
          %1165 = vst [vmem:[%s398 + $0x70] sm:$0xff] %v1149
          %1166 = vst [vmem:[%s398 + $0x78] sm:$0xff] %v1150
        $region76: #{tpu_custom_call.1} parent=47 // pred_fallthru
          _
        %s1167 = sand.u32 %s210, 1
        %s1168 = scalar_lea.sflag [#allocation5], %s1167
        %s1169 = sand.u32 %s210, 1
        %s1170 = smul.addr %s1169, 128
        %s1171 = scalar_lea.vmem [#allocation12], %s1170
        // Predicated region
        $region77: #{tpu_custom_call.1} parent=47 // pred_check
          %p1172 = pneg %p220
        $region78: #{tpu_custom_call.1} parent=47 // pred_check_branch
          %1174 = sbr.rel (%p1172) target = $region80
        $region79: #{tpu_custom_call.1} parent=47 // pred_region
          %s1175 = smul.u32 16, %s30
          %s1177 = ssub.s32 2048, 2048
          %1178 = vsyncadd %s1168, %s1177
          %s1179 = smul.addr %s1175, 128
          %s1180 = scalar_lea.hbm %s7, %s1179
          %s1181 = sshll.u32 %s1171, 4
          %s1182 = int_to_ptr.vmem [resolvable:$true] %s1181
          %1187 = dma.vmem_to_hbm [thread:$0]  %s1182, 2048, %s1180, %s1168, 128, 128, 8
        $region80: #{tpu_custom_call.1} parent=47 // pred_fallthru
          _
      $region48: #{tpu_custom_call.1} parent=5 // pred_fallthru
        _
      %p1188 = scmp.le.s32.totalorder 2, %s21
      // Predicated region
      $region81: #{tpu_custom_call.1} parent=5 // pred_check
        %p1189 = pneg %p1188
      $region82: #{tpu_custom_call.1} parent=5 // pred_check_branch
        %1191 = sbr.rel (%p1189) target = $region84
      $region83: #{tpu_custom_call.1} parent=5 // pred_region
        %s1192 = ssub.s32 %s21, 2
        // Predicated region
        $region85: #{tpu_custom_call.1} parent=83 // pred_check
          %p1193 = pneg %p226
        $region86: #{tpu_custom_call.1} parent=83 // pred_check_branch
          %1195 = sbr.rel (%p1193) target = $region88
        $region87: #{tpu_custom_call.1} parent=83 // pred_region
          %s1196 = sand.u32 %s211, 1
          %s1197 = scalar_lea.sflag [#allocation5], %s1196
          %s1198 = sand.u32 %s211, 1
          %s1199 = smul.addr %s1198, 128
          %s1200 = scalar_lea.vmem [#allocation12], %s1199
          %1201 = dma.done %s1197, 2048
        $region88: #{tpu_custom_call.1} parent=83 // pred_fallthru
          _
      $region84: #{tpu_custom_call.1} parent=5 // pred_fallthru
        _
    $region6: #{tpu_custom_call.1} parent=1 // loop_footer
      %s25 = sadd.s32 1, %s21
    $region7: #{tpu_custom_call.1} parent=1 // loop_footer_branch
      %20 = sbr.rel target = $region3
    $region8: #{tpu_custom_call.1} parent=1 // loop_exit
      _
    %1202 = vsyncpa [#allocation4], 1
    %s1203 = scalar_lea.sflag [#allocation4], 1
    %1204 = vsyncpa %s1203, 1
    %1205 = vsyncpa [#allocation7], 1
    %1206 = vsyncpa [#allocation10], 1
    %1207 = vsyncpa [#allocation5], 1
    %s1208 = scalar_lea.sflag [#allocation5], 1
    %1209 = vsyncpa %s1208, 1

</llo_original>
